<compile_context>
chip_gen: v6e
topology: v6e:2x2x1
jax: 0.10.0
libtpu: 0.0.40
codegen_flags: <defaults>
</compile_context>

<pallas_src>
import numpy as np
import jax
import jax.numpy as jnp
from jax import lax
from jax.experimental import pallas as pl
from jax.experimental.pallas import tpu as pltpu


# ----------------------------------------------------------------------------- #
# Module parameters / trace-time constants
# ----------------------------------------------------------------------------- #
def make_haar_weights(channel_in: int) -> np.ndarray:
    """Deterministic parameter init, identical to the PyTorch __init__."""
    w = np.ones((4, 1, 2, 2), np.float32)
    w[1, 0, 0, 1] = -1.0
    w[1, 0, 1, 1] = -1.0
    w[2, 0, 1, 0] = -1.0
    w[2, 0, 1, 1] = -1.0
    w[3, 0, 1, 0] = -1.0
    w[3, 0, 0, 1] = -1.0
    return np.concatenate([w] * int(channel_in), axis=0)  # (4*C, 1, 2, 2)


def haar_jacobian(x_shape, rev: bool = False) -> float:
    """`self.last_jac` bookkeeping of the PyTorch module (host-side scalar)."""
    _, c, h, w = x_shape
    elements = c * h * w
    return elements / 4 * (np.log(16.0) if rev else np.log(1 / 16.0))


def _combined_matrix(W: int) -> np.ndarray:
    """(2W, 4*Wh) matrix with entries in {+/-0.25, 0}: merged row
    [input row 2i | input row 2i+1] -> [o0 | o1 | o2 | o3] (1/4 scale folded in)."""
    Wh = W // 2
    w4 = make_haar_weights(1)[:4, 0].astype(np.float64) / 4.0   # (4,2,2), +/-0.25
    m = np.zeros((2 * W, 4 * Wh), np.float64)
    j = np.arange(Wh)
    for k in range(4):
        col = k * Wh + j
        m[2 * j, col] = w4[k, 0, 0]          # a = x[2i, 2j]
        m[2 * j + 1, col] = w4[k, 0, 1]      # b = x[2i, 2j+1]
        m[W + 2 * j, col] = w4[k, 1, 0]      # c = x[2i+1, 2j]
        m[W + 2 * j + 1, col] = w4[k, 1, 1]  # d = x[2i+1, 2j+1]
    return m.astype(np.float32)


def _chunk_butterfly_matrix(wchunk: int) -> np.ndarray:
    """(wchunk, wchunk) +/-0.25 matrix: interleaved columns -> [0.25*(even+odd) |
    0.25*(even-odd)].  Identical for every 256-column chunk (block-diagonal sw)."""
    wc = wchunk // 2
    m = np.zeros((wchunk, wchunk), np.float64)
    j = np.arange(wc)
    m[2 * j, j] = 0.25
    m[2 * j + 1, j] = 0.25
    m[2 * j, wc + j] = 0.25
    m[2 * j + 1, wc + j] = -0.25
    return m.astype(np.float32)


def _row_combination_coeffs() -> np.ndarray:
    """(4, 4) coefficients in {-1, 0, +1} (the 1/4 lives in the butterfly matrix):
    o_k = sum_t coeff[k, t] * basis_t, basis = (0.25(a+b), 0.25(a-b),
                                                0.25(c+d), 0.25(c-d))."""
    w4 = make_haar_weights(1)[:4, 0].astype(np.float64)   # +/-1 raw weights
    wa, wb, wc, wd = w4[:, 0, 0], w4[:, 0, 1], w4[:, 1, 0], w4[:, 1, 1]
    return np.stack([(wa + wb) / 2.0, (wa - wb) / 2.0,
                     (wc + wd) / 2.0, (wc - wd) / 2.0], axis=1)


# ----------------------------------------------------------------------------- #
# Kernels
# ----------------------------------------------------------------------------- #
def _make_combined_kernel(precision):
    """Narrow path: one (R, 2W) @ (2W, 4Wh) matmul -> lane-dense (R, 4Wh) slab."""
    def kernel(m_ref, x_ref, o_ref):
        y = jnp.dot(x_ref[...], m_ref[...],
                    preferred_element_type=jnp.float32, precision=precision)
        o_ref[...] = y.astype(o_ref.dtype)
    return kernel


def _make_chunked_kernel(coeffs, W: int, wchunk: int, precision):
    """Wide path: per-256-column-chunk butterfly matmul + (+/-1) row combination,
    component-separate 128-lane-aligned stores."""
    n_chunks = W // wchunk
    wc = wchunk // 2
    coeffs = [[float(v) for v in row] for row in np.asarray(coeffs)]
    for row in coeffs:
        for v in row:
            assert v in (-1.0, 0.0, 1.0), coeffs   # +/-1 coeffs -> adds/subs only

    def kernel(sw_ref, x_ref, o_ref):
        sw = sw_ref[...]                          # (wchunk, wchunk), +/-0.25

        def do_chunk(in_off, out_off):
            top = x_ref[0, :, pl.ds(in_off, wchunk)]        # even input rows
            bot = x_ref[0, :, pl.ds(W + in_off, wchunk)]    # odd input rows
            pt = jnp.dot(top, sw, preferred_element_type=jnp.float32,
                         precision=precision)               # [0.25(a+b) | 0.25(a-b)]
            pb = jnp.dot(bot, sw, preferred_element_type=jnp.float32,
                         precision=precision)               # [0.25(c+d) | 0.25(c-d)]
            basis = (pt[:, :wc], pt[:, wc:], pb[:, :wc], pb[:, wc:])
            for k in range(4):
                acc = None
                for cf, term in zip(coeffs[k], basis):
                    if cf == 0.0:
                        continue
                    if acc is None:
                        acc = term if cf > 0.0 else -term
                    elif cf > 0.0:
                        acc = acc + term
                    else:
                        acc = acc - term
                o_ref[0, k, :, pl.ds(out_off, wc)] = acc.astype(o_ref.dtype)

        if n_chunks == 1:
            do_chunk(0, 0)
        else:
            # fori_loop keeps the per-chunk f32 temporaries' live ranges bounded.
            def body(t, carry):
                do_chunk(pl.multiple_of(t * wchunk, wchunk),
                         pl.multiple_of(t * wc, wc))
                return carry
            lax.fori_loop(0, n_chunks, body, 0)

    return kernel


# ----------------------------------------------------------------------------- #
# Tiling / VMEM policy
# ----------------------------------------------------------------------------- #
def _vmem_budget_bytes() -> int:
    """Per-step double-buffered (in+out) block budget, per TPU generation."""
    try:
        kind = jax.devices()[0].device_kind.lower()
    except Exception:
        kind = ""
    if "v7" in kind or "7x" in kind:
        return 10 << 20      # 64 MiB physical / 32 MiB scoped default: stay modest
    if "v5" in kind or "v6" in kind:
        return 20 << 20      # 128 MiB parts: bigger tiles, fewer grid steps
    return 16 << 20


def _pick_row_tile(total_rows: int, per_row_bytes: int,
                   vmem_budget: int, min_steps: int = 8) -> int:
    """Largest row tile R that is a multiple of 8, divides total_rows, and keeps
    the double-buffered in+out blocks under vmem_budget; mildly prefers
    >= min_steps grid steps (pipelining / v7x megacore) while each step still
    moves >= ~1 MiB."""
    if total_rows <= 8 or total_rows % 8 != 0:
        return total_rows                      # full-extent block is always legal
    cap = max(8, vmem_budget // (2 * per_row_bytes))
    hi = min(total_rows, max(cap, 8))
    fitting = [r for r in range(8, hi + 1, 8) if total_rows % r == 0]
    if not fitting:
        return 8
    r = fitting[-1]
    if total_rows // r < min_steps:
        alts = [d for d in fitting
                if total_rows // d >= min_steps and d * per_row_bytes >= (1 << 20)]
        if alts:
            r = alts[-1]
    return r


def _vmem_limit(blk_in: int, blk_out: int, mat_bytes: int, temp_bytes: int) -> int:
    """Blocks (double-buffered) + matrix buffers + in-kernel f32 temporaries."""
    total = 2 * (blk_in + blk_out) + 2 * mat_bytes + temp_bytes + (2 << 20)
    return int(min(48 << 20, max(16 << 20, total)))


# ----------------------------------------------------------------------------- #
# Wrapper
# ----------------------------------------------------------------------------- #
def haar_downsampling(x: jax.Array, channel_in: int) -> jax.Array:
    """Forward (rev=False) of HaarDownsampling: [B, C, H, W] -> [B, 4C, H/2, W/2]."""
    B, C, H, W = x.shape
    assert C == channel_in
    assert H % 2 == 0 and W % 2 == 0
    Hh, Wh = H // 2, W // 2
    itemsize = jnp.dtype(x.dtype).itemsize

    if x.dtype == jnp.bfloat16:
        mat_dtype, precision = jnp.bfloat16, None            # single MXU pass, exact
    else:
        mat_dtype, precision = jnp.float32, lax.Precision.HIGHEST

    vmem_budget = _vmem_budget_bytes()
    per_row_bytes = 4 * W * itemsize          # 2W input lanes + 4*Wh output lanes

    if W >= 256 and W % 256 == 0:
        # ---------- wide path: component-separate output, chunked butterfly -----
        WCHUNK = 256
        rows = C * Hh
        R = _pick_row_tile(rows, per_row_bytes, vmem_budget)
        n_row_tiles = rows // R
        sw = jnp.asarray(_chunk_butterfly_matrix(WCHUNK), dtype=mat_dtype)
        coeffs = _row_combination_coeffs()

        # Free reshape: merged row r = c*Hh + i = [input row 2i | input row 2i+1].
        xr = x.reshape(B, rows, 2 * W)

        blk_in = R * 2 * W * itemsize
        blk_out = R * 4 * Wh * itemsize
        mat_b = int(sw.size) * jnp.dtype(mat_dtype).itemsize
        temps = 8 * R * WCHUNK * 4            # per-chunk f32 temporaries (generous)
        vmem_limit = _vmem_limit(blk_in, blk_out, mat_b, temps)

        out4 = pl.pallas_call(
            _make_chunked_kernel(coeffs, W, WCHUNK, precision),
            grid=(B, n_row_tiles),
            in_specs=[
                # small resident butterfly matrix (constant block index)
                pl.BlockSpec((WCHUNK, WCHUNK), lambda b, r: (0, 0)),
                pl.BlockSpec((1, R, 2 * W), lambda b, r: (b, r, 0)),
            ],
            out_specs=pl.BlockSpec((1, 4, R, Wh), lambda b, r: (b, 0, r, 0)),
            out_shape=jax.ShapeDtypeStruct((B, 4, rows, Wh), x.dtype),
            compiler_params=pltpu.CompilerParams(
                dimension_semantics=("parallel", "parallel"),
                vmem_limit_bytes=vmem_limit,
            ),
        )(sw, xr)
        # Free reshape: (B, 4, C*Hh, Wh) -> (B, 4C, Hh, Wh), channel = k*C + c.
        return out4.reshape(B, 4 * C, Hh, Wh)

    # ---------- narrow / awkward path: lane-dense (R, 4*Wh) output slab ---------
    total_rows = B * C * Hh                   # batch folded into the row axis
    R = _pick_row_tile(total_rows, per_row_bytes, vmem_budget)
    n_row_tiles = total_rows // R
    M = jnp.asarray(_combined_matrix(W), dtype=mat_dtype)
    xr = x.reshape(total_rows, 2 * W)         # free reshape (row-major reinterpret)

    blk_in = R * 2 * W * itemsize
    blk_out = R * 4 * Wh * itemsize
    mat_b = int(M.size) * jnp.dtype(mat_dtype).itemsize
    temps = 3 * R * 2 * W * 4                 # f32 matmul result + operand copies
    vmem_limit = _vmem_limit(blk_in, blk_out, mat_b, temps)

    out2 = pl.pallas_call(
        _make_combined_kernel(precision),
        grid=(n_row_tiles,),
        in_specs=[
            pl.BlockSpec((2 * W, 4 * Wh), lambda r: (0, 0)),
            pl.BlockSpec((R, 2 * W), lambda r: (r, 0)),
        ],
        out_specs=pl.BlockSpec((R, 4 * Wh), lambda r: (r, 0)),
        out_shape=jax.ShapeDtypeStruct((total_rows, 4 * Wh), x.dtype),
        compiler_params=pltpu.CompilerParams(
            dimension_semantics=("parallel",),
            vmem_limit_bytes=vmem_limit,
        ),
    )(M, xr)

    # Component-major channel reorder: one extra HBM pass over the (small) output,
    # which wins vs lane-masked per-component stores when Wh < 128.
    out = out2.reshape(B, C, Hh, 4, Wh)
    out = jnp.transpose(out, (0, 3, 1, 2, 4))
    return out.reshape(B, 4 * C, Hh, Wh)


# ----------------------------------------------------------------------------- #
# Pure-XLA reference (mirrors F.conv2d(stride=2, groups=C) + /4 + channel reorder)
# ----------------------------------------------------------------------------- #
def haar_downsampling_reference(x: jax.Array, channel_in: int) -> jax.Array:
    B, C, H, W = x.shape
    k22 = jnp.asarray(make_haar_weights(channel_in)[:4, 0])   # (4, 2, 2)
    a = x[:, :, 0::2, 0::2]
    b = x[:, :, 0::2, 1::2]
    c = x[:, :, 1::2, 0::2]
    d = x[:, :, 1::2, 1::2]
    comps = [(k22[k, 0, 0] * a + k22[k, 0, 1] * b
              + k22[k, 1, 0] * c + k22[k, 1, 1] * d) / 4.0 for k in range(4)]
    return jnp.concatenate(comps, axis=1)                      # channel = k*C + c


if __name__ == "__main__":
    key = jax.random.PRNGKey(0)
    k1, k2 = jax.random.split(key)
    haar = jax.jit(haar_downsampling, static_argnums=1)

    # 1) Small / narrow feature map -> lane-dense combined-matrix path.
    B, C, H, W = 2, 4, 16, 16
    x = jax.random.normal(k1, (B, C, H, W), dtype=jnp.float32)
    out = jax.block_until_ready(haar(x, C))
    ref = haar_downsampling_reference(x, C)
    assert out.shape == (B, 4 * C, H // 2, W // 2), out.shape
    np.testing.assert_allclose(np.asarray(out), np.asarray(ref),
                               rtol=1e-4, atol=1e-4)

    # 2) Wide feature map (W % 256 == 0) -> chunked component-separate path.
    B2, C2, H2, W2 = 1, 2, 8, 512
    x2 = jax.random.normal(k2, (B2, C2, H2, W2), dtype=jnp.float32)
    out2 = jax.block_until_ready(haar(x2, C2))
    ref2 = haar_downsampling_reference(x2, C2)
    assert out2.shape == (B2, 4 * C2, H2 // 2, W2 // 2), out2.shape
    np.testing.assert_allclose(np.asarray(out2), np.asarray(ref2),
                               rtol=1e-4, atol=1e-4)

    print("KERNEL_OK")
</pallas_src>

<mosaic_0001>
module attributes {stable_mosaic.version = 11 : i64} {
  func.func @kernel(%arg0: i32, %arg1: memref<32x32xf32, #tpu.memory_space<vmem>>, %arg2: memref<64x32xf32, #tpu.memory_space<vmem>>, %arg3: memref<64x32xf32, #tpu.memory_space<vmem>>) attributes {dimension_semantics = [#tpu.dimension_semantics<parallel>], iteration_bounds = array<i64: 1>, scalar_prefetch = 0 : i64, scratch_operands = 0 : i64, tpu.core_type = #tpu.core_type<tc>, window_params = [{pipeline_mode = #tpu.pipeline_mode<synchronous>, transform_indices = @transform_0, window_bounds = array<i64: 32, 32>}, {transform_indices = @transform_1, window_bounds = array<i64: 64, 32>}, {transform_indices = @transform_2, window_bounds = array<i64: 64, 32>}]} {
    %c0 = arith.constant 0 : index
    %c0_0 = arith.constant 0 : index
    %0 = vector.load %arg2[%c0, %c0_0] : memref<64x32xf32, #tpu.memory_space<vmem>>, vector<64x32xf32>
    %c0_1 = arith.constant 0 : index
    %c0_2 = arith.constant 0 : index
    %1 = vector.load %arg1[%c0_1, %c0_2] : memref<32x32xf32, #tpu.memory_space<vmem>>, vector<32x32xf32>
    %cst = arith.constant dense<0.000000e+00> : vector<64x32xf32>
    %2 = tpu.matmul %0, %1, %cst {dimension_numbers = #tpu.dot_dimension_numbers<[1], [0], [0], [1], [0, 0, 1, 1], [], []>, precision = #tpu.contract_precision<fp32>} : vector<64x32xf32>, vector<32x32xf32>, vector<64x32xf32> -> vector<64x32xf32>
    %c0_3 = arith.constant 0 : index
    %c0_4 = arith.constant 0 : index
    %3 = vector.load %arg3[%c0_3, %c0_4] : memref<64x32xf32, #tpu.memory_space<vmem>>, vector<64x32xf32>
    tpu.vector_store %arg3[%c0_3, %c0_4], %2 {strides = array<i32>} : memref<64x32xf32, #tpu.memory_space<vmem>>, vector<64x32xf32>,
    return
  }
  func.func @transform_0(%arg0: i32) -> (i32, i32) {
    %c0_i32 = arith.constant 0 : i32
    %c0_i32_0 = arith.constant 0 : i32
    %c0_i32_1 = arith.constant 0 : i32
    return %c0_i32, %c0_i32_0 : i32, i32
  }
  func.func @transform_1(%arg0: i32) -> (i32, i32) {
    %c0_i32 = arith.constant 0 : i32
    %c0_i32_0 = arith.constant 0 : i32
    return %arg0, %c0_i32 : i32, i32
  }
  func.func @transform_2(%arg0: i32) -> (i32, i32) {
    %c0_i32 = arith.constant 0 : i32
    %c0_i32_0 = arith.constant 0 : i32
    return %arg0, %c0_i32 : i32, i32
  }
}

</mosaic_0001>

<llo_original>
// kernel: haar_downsampling.1
$region0: #{haar_downsampling.1}
  #allocation0 [shape = 'u32[]', space=smem, size = 0x4, offset = 0x4, fixed_abs, tag = 'smem constant byte address 0x4 - core index']
  #allocation1 [shape = 'u32[144,128]{1,0:T(1,128)}', space=vmem, size = 0x12000, scoped, tag = 'internal scratch']
  %s0 = inlined_call_operand.vmem [shape: f32[32,32], index: 0, kind: input, shape index: {}]
  %s1 = inlined_call_operand.vmem [shape: f32[64,32], index: 1, kind: input, shape index: {}]
  %s2 = inlined_call_operand.vmem [shape: f32[64,32], index: 2, kind: output, shape index: {}]
  %s3 = sld [smem:[#allocation0]]
  $region18: #{haar_downsampling.1} parent=0
    _
  %s5 = ssub.s32 1, %s3
  %s6 = scalar_select 0, %s5, %s3
  // Predicated region
  $region2: #{haar_downsampling.1} parent=0 // pred_check
    _
  $region3: #{haar_downsampling.1} parent=0 // pred_check_branch
    %8 = sbr.rel (0) target = $region5
  $region4: #{haar_downsampling.1} parent=0 // pred_region
    _
  $region5: #{haar_downsampling.1} parent=0 // pred_fallthru
    _
  // Predicated region
  $region6: #{haar_downsampling.1} parent=0 // pred_check
    _
  $region7: #{haar_downsampling.1} parent=0 // pred_check_branch
    %10 = sbr.rel (0) target = $region9
  $region8: #{haar_downsampling.1} parent=0 // pred_region
    _
  $region9: #{haar_downsampling.1} parent=0 // pred_fallthru
    _
  %v11 = vld [vmem:[%s1] sm:$0xff]
  %v12 = vld [vmem:[%s1 + $0x8] sm:$0xff]
  %v13 = vld [vmem:[%s1 + $0x10] sm:$0xff]
  %v14 = vld [vmem:[%s1 + $0x18] sm:$0xff]
  %v15 = vld [vmem:[%s1 + $0x20] sm:$0xff]
  %v16 = vld [vmem:[%s1 + $0x28] sm:$0xff]
  %v17 = vld [vmem:[%s1 + $0x30] sm:$0xff]
  %v18 = vld [vmem:[%s1 + $0x38] sm:$0xff]
  %v19 = vld [vmem:[%s0] sm:$0xff]
  %v20 = vld [vmem:[%s0 + $0x8] sm:$0xff]
  %v21 = vld [vmem:[%s0 + $0x10] sm:$0xff]
  %v22 = vld [vmem:[%s0 + $0x18] sm:$0xff]
  %vm23 = vcmask 261120
  %v25 = vsel %vm23, %v11, 0
  %v28 = vsel %vm23, %v12, 0
  %v31 = vsel %vm23, %v13, 0
  %v34 = vsel %vm23, %v14, 0
  %v37 = vsel %vm23, %v15, 0
  %v40 = vsel %vm23, %v16, 0
  %v43 = vsel %vm23, %v17, 0
  %v46 = vsel %vm23, %v18, 0
  %48 = vmatprep.subr.mxu0 0.0
  %49 = vmatpush1.msra.mxu0 0.0
  %50 = vmatprep.subr.mxu0 0.0
  %51 = vmatpush1.msra.mxu0 0.0
  %52 = vmatprep.subr.mxu0 0.0
  %53 = vmatpush1.msra.mxu0 0.0
  %54 = vmatprep.subr.mxu0 0.0
  %55 = vmatpush1.msra.mxu0 0.0
  %56 = vmatprep.subr.mxu0 0.0
  %57 = vmatpush1.msra.mxu0 0.0
  %58 = vmatprep.subr.mxu0 0.0
  %59 = vmatpush1.msra.mxu0 0.0
  %60 = vmatprep.subr.mxu0 0.0
  %61 = vmatpush1.msra.mxu0 0.0
  %62 = vmatprep.subr.mxu0 0.0
  %63 = vmatpush1.msra.mxu0 0.0
  %64 = vmatprep.subr.mxu0 0.0
  %65 = vmatpush1.msra.mxu0 0.0
  %66 = vmatprep.subr.mxu0 0.0
  %67 = vmatpush1.msra.mxu0 0.0
  %68 = vmatprep.subr.mxu0 0.0
  %69 = vmatpush1.msra.mxu0 0.0
  %70 = vmatprep.subr.mxu0 0.0
  %71 = vmatpush1.msra.mxu0 0.0
  %72 = vmatprep.subr.mxu0 0.0
  %v73 = vand.u32 %v22, 4294901760
  %74 = vmatpush1.msra.mxu0 %v73
  %75 = vmatprep.subr.mxu0 0.0
  %v76 = vand.u32 %v21, 4294901760
  %77 = vmatpush1.msra.mxu0 %v76
  %78 = vmatprep.subr.mxu0 0.0
  %v79 = vand.u32 %v20, 4294901760
  %80 = vmatpush1.msra.mxu0 %v79
  %81 = vmatprep.subr.mxu0 0.0
  %v82 = vand.u32 %v19, 4294901760
  %83 = vmatpush1.msra.mxu0 %v82
  %84 = vmatprep.subr.mxu0 0.0
  %85 = vmatpush2.msra.mxu0 0.0
  %86 = vmatprep.subr.mxu0 0.0
  %87 = vmatpush2.msra.mxu0 0.0
  %88 = vmatprep.subr.mxu0 0.0
  %89 = vmatpush2.msra.mxu0 0.0
  %90 = vmatprep.subr.mxu0 0.0
  %91 = vmatpush2.msra.mxu0 0.0
  %92 = vmatprep.subr.mxu0 0.0
  %93 = vmatpush2.msra.mxu0 0.0
  %94 = vmatprep.subr.mxu0 0.0
  %95 = vmatpush2.msra.mxu0 0.0
  %96 = vmatprep.subr.mxu0 0.0
  %97 = vmatpush2.msra.mxu0 0.0
  %98 = vmatprep.subr.mxu0 0.0
  %99 = vmatpush2.msra.mxu0 0.0
  %100 = vmatprep.subr.mxu0 0.0
  %101 = vmatpush2.msra.mxu0 0.0
  %102 = vmatprep.subr.mxu0 0.0
  %103 = vmatpush2.msra.mxu0 0.0
  %104 = vmatprep.subr.mxu0 0.0
  %105 = vmatpush2.msra.mxu0 0.0
  %106 = vmatprep.subr.mxu0 0.0
  %107 = vmatpush2.msra.mxu0 0.0
  %108 = vmatprep.subr.mxu0 0.0
  %109 = vmatpush2.msra.mxu0 0.0
  %110 = vmatprep.subr.mxu0 0.0
  %111 = vmatpush2.msra.mxu0 0.0
  %112 = vmatprep.subr.mxu0 0.0
  %113 = vmatpush2.msra.mxu0 0.0
  %114 = vmatprep.subr.mxu0 0.0
  %115 = vmatpush2.msra.mxu0 0.0
  %116 = vmatprep.mubr.f32.mxu0 0.0
  %v117 = vand.u32 %v25, 4294901760
  %v118 = vsub.f32 %v25, %v117
  %v119 = vand.u32 %v118, 4294901760
  %v120 = vsub.f32 %v118, %v119
  %v121 = vand.u32 %v120, 4294901760
  %122 = vmatmul.mubr.f32.gmra.mxu0 %v121
  %v123 = vpop.f32.mrf.mxu0
  %v124 = vadd.f32 0.0, %v123
  %v125 = vpop.f32.mrf.mxu0
  %126 = vmatprep.mubr.f32.mxu0 0.0
  %v127 = vand.u32 %v28, 4294901760
  %v128 = vsub.f32 %v28, %v127
  %v129 = vand.u32 %v128, 4294901760
  %v130 = vsub.f32 %v128, %v129
  %v131 = vand.u32 %v130, 4294901760
  %132 = vmatmul.mubr.f32.gmra.mxu0 %v131
  %v133 = vpop.f32.mrf.mxu0
  %v134 = vadd.f32 0.0, %v133
  %v135 = vpop.f32.mrf.mxu0
  %136 = vmatprep.mubr.f32.mxu0 0.0
  %v137 = vand.u32 %v31, 4294901760
  %v138 = vsub.f32 %v31, %v137
  %v139 = vand.u32 %v138, 4294901760
  %v140 = vsub.f32 %v138, %v139
  %v141 = vand.u32 %v140, 4294901760
  %142 = vmatmul.mubr.f32.gmra.mxu0 %v141
  %v143 = vpop.f32.mrf.mxu0
  %v144 = vadd.f32 0.0, %v143
  %v145 = vpop.f32.mrf.mxu0
  %146 = vmatprep.mubr.f32.mxu0 0.0
  %v147 = vand.u32 %v34, 4294901760
  %v148 = vsub.f32 %v34, %v147
  %v149 = vand.u32 %v148, 4294901760
  %v150 = vsub.f32 %v148, %v149
  %v151 = vand.u32 %v150, 4294901760
  %152 = vmatmul.mubr.f32.gmra.mxu0 %v151
  %v153 = vpop.f32.mrf.mxu0
  %v154 = vadd.f32 0.0, %v153
  %v155 = vpop.f32.mrf.mxu0
  %156 = vmatprep.mubr.f32.mxu0 0.0
  %v157 = vand.u32 %v37, 4294901760
  %v158 = vsub.f32 %v37, %v157
  %v159 = vand.u32 %v158, 4294901760
  %v160 = vsub.f32 %v158, %v159
  %v161 = vand.u32 %v160, 4294901760
  %162 = vmatmul.mubr.f32.gmra.mxu0 %v161
  %v163 = vpop.f32.mrf.mxu0
  %v164 = vadd.f32 0.0, %v163
  %v165 = vpop.f32.mrf.mxu0
  %166 = vmatprep.mubr.f32.mxu0 0.0
  %v167 = vand.u32 %v40, 4294901760
  %v168 = vsub.f32 %v40, %v167
  %v169 = vand.u32 %v168, 4294901760
  %v170 = vsub.f32 %v168, %v169
  %v171 = vand.u32 %v170, 4294901760
  %172 = vmatmul.mubr.f32.gmra.mxu0 %v171
  %v173 = vpop.f32.mrf.mxu0
  %v174 = vadd.f32 0.0, %v173
  %v175 = vpop.f32.mrf.mxu0
  %176 = vmatprep.mubr.f32.mxu0 0.0
  %v177 = vand.u32 %v43, 4294901760
  %v178 = vsub.f32 %v43, %v177
  %v179 = vand.u32 %v178, 4294901760
  %v180 = vsub.f32 %v178, %v179
  %v181 = vand.u32 %v180, 4294901760
  %182 = vmatmul.mubr.f32.gmra.mxu0 %v181
  %v183 = vpop.f32.mrf.mxu0
  %v184 = vadd.f32 0.0, %v183
  %v185 = vpop.f32.mrf.mxu0
  %186 = vmatprep.mubr.f32.mxu0 0.0
  %v187 = vand.u32 %v46, 4294901760
  %v188 = vsub.f32 %v46, %v187
  %v189 = vand.u32 %v188, 4294901760
  %v190 = vsub.f32 %v188, %v189
  %v191 = vand.u32 %v190, 4294901760
  %192 = vmatmul.mubr.f32.gmra.mxu0 %v191
  %v193 = vpop.f32.mrf.mxu0
  %v194 = vadd.f32 0.0, %v193
  %v195 = vpop.f32.mrf.mxu0
  %196 = vdwg.mxu0
  %197 = vmatprep.subr.mxu0 0.0
  %198 = vmatpush1.msra.mxu0 0.0
  %199 = vmatprep.subr.mxu0 0.0
  %200 = vmatpush1.msra.mxu0 0.0
  %201 = vmatprep.subr.mxu0 0.0
  %202 = vmatpush1.msra.mxu0 0.0
  %203 = vmatprep.subr.mxu0 0.0
  %204 = vmatpush1.msra.mxu0 0.0
  %205 = vmatprep.subr.mxu0 0.0
  %206 = vmatpush1.msra.mxu0 0.0
  %207 = vmatprep.subr.mxu0 0.0
  %208 = vmatpush1.msra.mxu0 0.0
  %209 = vmatprep.subr.mxu0 0.0
  %210 = vmatpush1.msra.mxu0 0.0
  %211 = vmatprep.subr.mxu0 0.0
  %212 = vmatpush1.msra.mxu0 0.0
  %213 = vmatprep.subr.mxu0 0.0
  %214 = vmatpush1.msra.mxu0 0.0
  %215 = vmatprep.subr.mxu0 0.0
  %216 = vmatpush1.msra.mxu0 0.0
  %217 = vmatprep.subr.mxu0 0.0
  %218 = vmatpush1.msra.mxu0 0.0
  %219 = vmatprep.subr.mxu0 0.0
  %220 = vmatpush1.msra.mxu0 0.0
  %221 = vmatprep.subr.mxu0 0.0
  %v222 = vand.u32 %v22, 4294901760
  %v223 = vsub.f32 %v22, %v222
  %v224 = vand.u32 %v223, 4294901760
  %v225 = vsub.f32 %v223, %v224
  %v226 = vand.u32 %v225, 4294901760
  %227 = vmatpush1.msra.mxu0 %v226
  %228 = vmatprep.subr.mxu0 0.0
  %v229 = vand.u32 %v21, 4294901760
  %v230 = vsub.f32 %v21, %v229
  %v231 = vand.u32 %v230, 4294901760
  %v232 = vsub.f32 %v230, %v231
  %v233 = vand.u32 %v232, 4294901760
  %234 = vmatpush1.msra.mxu0 %v233
  %235 = vmatprep.subr.mxu0 0.0
  %v236 = vand.u32 %v20, 4294901760
  %v237 = vsub.f32 %v20, %v236
  %v238 = vand.u32 %v237, 4294901760
  %v239 = vsub.f32 %v237, %v238
  %v240 = vand.u32 %v239, 4294901760
  %241 = vmatpush1.msra.mxu0 %v240
  %242 = vmatprep.subr.mxu0 0.0
  %v243 = vand.u32 %v19, 4294901760
  %v244 = vsub.f32 %v19, %v243
  %v245 = vand.u32 %v244, 4294901760
  %v246 = vsub.f32 %v244, %v245
  %v247 = vand.u32 %v246, 4294901760
  %248 = vmatpush1.msra.mxu0 %v247
  %249 = vmatprep.subr.mxu0 0.0
  %250 = vmatpush2.msra.mxu0 0.0
  %251 = vmatprep.subr.mxu0 0.0
  %252 = vmatpush2.msra.mxu0 0.0
  %253 = vmatprep.subr.mxu0 0.0
  %254 = vmatpush2.msra.mxu0 0.0
  %255 = vmatprep.subr.mxu0 0.0
  %256 = vmatpush2.msra.mxu0 0.0
  %257 = vmatprep.subr.mxu0 0.0
  %258 = vmatpush2.msra.mxu0 0.0
  %259 = vmatprep.subr.mxu0 0.0
  %260 = vmatpush2.msra.mxu0 0.0
  %261 = vmatprep.subr.mxu0 0.0
  %262 = vmatpush2.msra.mxu0 0.0
  %263 = vmatprep.subr.mxu0 0.0
  %264 = vmatpush2.msra.mxu0 0.0
  %265 = vmatprep.subr.mxu0 0.0
  %266 = vmatpush2.msra.mxu0 0.0
  %267 = vmatprep.subr.mxu0 0.0
  %268 = vmatpush2.msra.mxu0 0.0
  %269 = vmatprep.subr.mxu0 0.0
  %270 = vmatpush2.msra.mxu0 0.0
  %271 = vmatprep.subr.mxu0 0.0
  %272 = vmatpush2.msra.mxu0 0.0
  %273 = vmatprep.subr.mxu0 0.0
  %274 = vmatpush2.msra.mxu0 0.0
  %275 = vmatprep.subr.mxu0 0.0
  %276 = vmatpush2.msra.mxu0 0.0
  %277 = vmatprep.subr.mxu0 0.0
  %278 = vmatpush2.msra.mxu0 0.0
  %279 = vmatprep.subr.mxu0 0.0
  %280 = vmatpush2.msra.mxu0 0.0
  %281 = vmatprep.mubr.f32.mxu0 0.0
  %v282 = vand.u32 %v25, 4294901760
  %283 = vmatmul.mubr.f32.gmra.mxu0 %v282
  %v284 = vpop.f32.mrf.mxu0
  %v285 = vadd.f32 %v124, %v284
  %v286 = vpop.f32.mrf.mxu0
  %287 = vmatprep.mubr.f32.mxu0 0.0
  %v288 = vand.u32 %v28, 4294901760
  %289 = vmatmul.mubr.f32.gmra.mxu0 %v288
  %v290 = vpop.f32.mrf.mxu0
  %v291 = vadd.f32 %v134, %v290
  %v292 = vpop.f32.mrf.mxu0
  %293 = vmatprep.mubr.f32.mxu0 0.0
  %v294 = vand.u32 %v31, 4294901760
  %295 = vmatmul.mubr.f32.gmra.mxu0 %v294
  %v296 = vpop.f32.mrf.mxu0
  %v297 = vadd.f32 %v144, %v296
  %v298 = vpop.f32.mrf.mxu0
  %299 = vmatprep.mubr.f32.mxu0 0.0
  %v300 = vand.u32 %v34, 4294901760
  %301 = vmatmul.mubr.f32.gmra.mxu0 %v300
  %v302 = vpop.f32.mrf.mxu0
  %v303 = vadd.f32 %v154, %v302
  %v304 = vpop.f32.mrf.mxu0
  %305 = vmatprep.mubr.f32.mxu0 0.0
  %v306 = vand.u32 %v37, 4294901760
  %307 = vmatmul.mubr.f32.gmra.mxu0 %v306
  %v308 = vpop.f32.mrf.mxu0
  %v309 = vadd.f32 %v164, %v308
  %v310 = vpop.f32.mrf.mxu0
  %311 = vmatprep.mubr.f32.mxu0 0.0
  %v312 = vand.u32 %v40, 4294901760
  %313 = vmatmul.mubr.f32.gmra.mxu0 %v312
  %v314 = vpop.f32.mrf.mxu0
  %v315 = vadd.f32 %v174, %v314
  %v316 = vpop.f32.mrf.mxu0
  %317 = vmatprep.mubr.f32.mxu0 0.0
  %v318 = vand.u32 %v43, 4294901760
  %319 = vmatmul.mubr.f32.gmra.mxu0 %v318
  %v320 = vpop.f32.mrf.mxu0
  %v321 = vadd.f32 %v184, %v320
  %v322 = vpop.f32.mrf.mxu0
  %323 = vmatprep.mubr.f32.mxu0 0.0
  %v324 = vand.u32 %v46, 4294901760
  %325 = vmatmul.mubr.f32.gmra.mxu0 %v324
  %v326 = vpop.f32.mrf.mxu0
  %v327 = vadd.f32 %v194, %v326
  %v328 = vpop.f32.mrf.mxu0
  %329 = vdwg.mxu0
  %330 = vmatprep.subr.mxu0 0.0
  %331 = vmatpush1.msra.mxu0 0.0
  %332 = vmatprep.subr.mxu0 0.0
  %333 = vmatpush1.msra.mxu0 0.0
  %334 = vmatprep.subr.mxu0 0.0
  %335 = vmatpush1.msra.mxu0 0.0
  %336 = vmatprep.subr.mxu0 0.0
  %337 = vmatpush1.msra.mxu0 0.0
  %338 = vmatprep.subr.mxu0 0.0
  %339 = vmatpush1.msra.mxu0 0.0
  %340 = vmatprep.subr.mxu0 0.0
  %341 = vmatpush1.msra.mxu0 0.0
  %342 = vmatprep.subr.mxu0 0.0
  %343 = vmatpush1.msra.mxu0 0.0
  %344 = vmatprep.subr.mxu0 0.0
  %345 = vmatpush1.msra.mxu0 0.0
  %346 = vmatprep.subr.mxu0 0.0
  %347 = vmatpush1.msra.mxu0 0.0
  %348 = vmatprep.subr.mxu0 0.0
  %349 = vmatpush1.msra.mxu0 0.0
  %350 = vmatprep.subr.mxu0 0.0
  %351 = vmatpush1.msra.mxu0 0.0
  %352 = vmatprep.subr.mxu0 0.0
  %353 = vmatpush1.msra.mxu0 0.0
  %354 = vmatprep.subr.mxu0 0.0
  %v355 = vand.u32 %v22, 4294901760
  %v356 = vsub.f32 %v22, %v355
  %357 = vmatpush1.msra.mxu0 %v356
  %358 = vmatprep.subr.mxu0 0.0
  %v359 = vand.u32 %v21, 4294901760
  %v360 = vsub.f32 %v21, %v359
  %361 = vmatpush1.msra.mxu0 %v360
  %362 = vmatprep.subr.mxu0 0.0
  %v363 = vand.u32 %v20, 4294901760
  %v364 = vsub.f32 %v20, %v363
  %365 = vmatpush1.msra.mxu0 %v364
  %366 = vmatprep.subr.mxu0 0.0
  %v367 = vand.u32 %v19, 4294901760
  %v368 = vsub.f32 %v19, %v367
  %369 = vmatpush1.msra.mxu0 %v368
  %370 = vmatprep.subr.mxu0 0.0
  %371 = vmatpush2.msra.mxu0 0.0
  %372 = vmatprep.subr.mxu0 0.0
  %373 = vmatpush2.msra.mxu0 0.0
  %374 = vmatprep.subr.mxu0 0.0
  %375 = vmatpush2.msra.mxu0 0.0
  %376 = vmatprep.subr.mxu0 0.0
  %377 = vmatpush2.msra.mxu0 0.0
  %378 = vmatprep.subr.mxu0 0.0
  %379 = vmatpush2.msra.mxu0 0.0
  %380 = vmatprep.subr.mxu0 0.0
  %381 = vmatpush2.msra.mxu0 0.0
  %382 = vmatprep.subr.mxu0 0.0
  %383 = vmatpush2.msra.mxu0 0.0
  %384 = vmatprep.subr.mxu0 0.0
  %385 = vmatpush2.msra.mxu0 0.0
  %386 = vmatprep.subr.mxu0 0.0
  %387 = vmatpush2.msra.mxu0 0.0
  %388 = vmatprep.subr.mxu0 0.0
  %389 = vmatpush2.msra.mxu0 0.0
  %390 = vmatprep.subr.mxu0 0.0
  %391 = vmatpush2.msra.mxu0 0.0
  %392 = vmatprep.subr.mxu0 0.0
  %393 = vmatpush2.msra.mxu0 0.0
  %394 = vmatprep.subr.mxu0 0.0
  %395 = vmatpush2.msra.mxu0 0.0
  %396 = vmatprep.subr.mxu0 0.0
  %397 = vmatpush2.msra.mxu0 0.0
  %398 = vmatprep.subr.mxu0 0.0
  %399 = vmatpush2.msra.mxu0 0.0
  %400 = vmatprep.subr.mxu0 0.0
  %401 = vmatpush2.msra.mxu0 0.0
  %402 = vmatprep.mubr.f32.mxu0 0.0
  %v403 = vand.u32 %v25, 4294901760
  %v404 = vsub.f32 %v25, %v403
  %405 = vmatmul.mubr.f32.gmra.mxu0 %v404
  %v406 = vpop.f32.mrf.mxu0
  %v407 = vadd.f32 %v285, %v406
  %v408 = vpop.f32.mrf.mxu0
  %409 = vmatprep.mubr.f32.mxu0 0.0
  %v410 = vand.u32 %v28, 4294901760
  %v411 = vsub.f32 %v28, %v410
  %412 = vmatmul.mubr.f32.gmra.mxu0 %v411
  %v413 = vpop.f32.mrf.mxu0
  %v414 = vadd.f32 %v291, %v413
  %v415 = vpop.f32.mrf.mxu0
  %416 = vmatprep.mubr.f32.mxu0 0.0
  %v417 = vand.u32 %v31, 4294901760
  %v418 = vsub.f32 %v31, %v417
  %419 = vmatmul.mubr.f32.gmra.mxu0 %v418
  %v420 = vpop.f32.mrf.mxu0
  %v421 = vadd.f32 %v297, %v420
  %v422 = vpop.f32.mrf.mxu0
  %423 = vmatprep.mubr.f32.mxu0 0.0
  %v424 = vand.u32 %v34, 4294901760
  %v425 = vsub.f32 %v34, %v424
  %426 = vmatmul.mubr.f32.gmra.mxu0 %v425
  %v427 = vpop.f32.mrf.mxu0
  %v428 = vadd.f32 %v303, %v427
  %v429 = vpop.f32.mrf.mxu0
  %430 = vmatprep.mubr.f32.mxu0 0.0
  %v431 = vand.u32 %v37, 4294901760
  %v432 = vsub.f32 %v37, %v431
  %433 = vmatmul.mubr.f32.gmra.mxu0 %v432
  %v434 = vpop.f32.mrf.mxu0
  %v435 = vadd.f32 %v309, %v434
  %v436 = vpop.f32.mrf.mxu0
  %437 = vmatprep.mubr.f32.mxu0 0.0
  %v438 = vand.u32 %v40, 4294901760
  %v439 = vsub.f32 %v40, %v438
  %440 = vmatmul.mubr.f32.gmra.mxu0 %v439
  %v441 = vpop.f32.mrf.mxu0
  %v442 = vadd.f32 %v315, %v441
  %v443 = vpop.f32.mrf.mxu0
  %444 = vmatprep.mubr.f32.mxu0 0.0
  %v445 = vand.u32 %v43, 4294901760
  %v446 = vsub.f32 %v43, %v445
  %447 = vmatmul.mubr.f32.gmra.mxu0 %v446
  %v448 = vpop.f32.mrf.mxu0
  %v449 = vadd.f32 %v321, %v448
  %v450 = vpop.f32.mrf.mxu0
  %451 = vmatprep.mubr.f32.mxu0 0.0
  %v452 = vand.u32 %v46, 4294901760
  %v453 = vsub.f32 %v46, %v452
  %454 = vmatmul.mubr.f32.gmra.mxu0 %v453
  %v455 = vpop.f32.mrf.mxu0
  %v456 = vadd.f32 %v327, %v455
  %v457 = vpop.f32.mrf.mxu0
  %458 = vdwg.mxu0
  %459 = vmatprep.subr.mxu0 0.0
  %460 = vmatpush1.msra.mxu0 0.0
  %461 = vmatprep.subr.mxu0 0.0
  %462 = vmatpush1.msra.mxu0 0.0
  %463 = vmatprep.subr.mxu0 0.0
  %464 = vmatpush1.msra.mxu0 0.0
  %465 = vmatprep.subr.mxu0 0.0
  %466 = vmatpush1.msra.mxu0 0.0
  %467 = vmatprep.subr.mxu0 0.0
  %468 = vmatpush1.msra.mxu0 0.0
  %469 = vmatprep.subr.mxu0 0.0
  %470 = vmatpush1.msra.mxu0 0.0
  %471 = vmatprep.subr.mxu0 0.0
  %472 = vmatpush1.msra.mxu0 0.0
  %473 = vmatprep.subr.mxu0 0.0
  %474 = vmatpush1.msra.mxu0 0.0
  %475 = vmatprep.subr.mxu0 0.0
  %476 = vmatpush1.msra.mxu0 0.0
  %477 = vmatprep.subr.mxu0 0.0
  %478 = vmatpush1.msra.mxu0 0.0
  %479 = vmatprep.subr.mxu0 0.0
  %480 = vmatpush1.msra.mxu0 0.0
  %481 = vmatprep.subr.mxu0 0.0
  %482 = vmatpush1.msra.mxu0 0.0
  %483 = vmatprep.subr.mxu0 0.0
  %v484 = vand.u32 %v22, 4294901760
  %485 = vmatpush1.msra.mxu0 %v484
  %486 = vmatprep.subr.mxu0 0.0
  %v487 = vand.u32 %v21, 4294901760
  %488 = vmatpush1.msra.mxu0 %v487
  %489 = vmatprep.subr.mxu0 0.0
  %v490 = vand.u32 %v20, 4294901760
  %491 = vmatpush1.msra.mxu0 %v490
  %492 = vmatprep.subr.mxu0 0.0
  %v493 = vand.u32 %v19, 4294901760
  %494 = vmatpush1.msra.mxu0 %v493
  %495 = vmatprep.subr.mxu0 0.0
  %496 = vmatpush2.msra.mxu0 0.0
  %497 = vmatprep.subr.mxu0 0.0
  %498 = vmatpush2.msra.mxu0 0.0
  %499 = vmatprep.subr.mxu0 0.0
  %500 = vmatpush2.msra.mxu0 0.0
  %501 = vmatprep.subr.mxu0 0.0
  %502 = vmatpush2.msra.mxu0 0.0
  %503 = vmatprep.subr.mxu0 0.0
  %504 = vmatpush2.msra.mxu0 0.0
  %505 = vmatprep.subr.mxu0 0.0
  %506 = vmatpush2.msra.mxu0 0.0
  %507 = vmatprep.subr.mxu0 0.0
  %508 = vmatpush2.msra.mxu0 0.0
  %509 = vmatprep.subr.mxu0 0.0
  %510 = vmatpush2.msra.mxu0 0.0
  %511 = vmatprep.subr.mxu0 0.0
  %512 = vmatpush2.msra.mxu0 0.0
  %513 = vmatprep.subr.mxu0 0.0
  %514 = vmatpush2.msra.mxu0 0.0
  %515 = vmatprep.subr.mxu0 0.0
  %516 = vmatpush2.msra.mxu0 0.0
  %517 = vmatprep.subr.mxu0 0.0
  %518 = vmatpush2.msra.mxu0 0.0
  %519 = vmatprep.subr.mxu0 0.0
  %520 = vmatpush2.msra.mxu0 0.0
  %521 = vmatprep.subr.mxu0 0.0
  %522 = vmatpush2.msra.mxu0 0.0
  %523 = vmatprep.subr.mxu0 0.0
  %524 = vmatpush2.msra.mxu0 0.0
  %525 = vmatprep.subr.mxu0 0.0
  %526 = vmatpush2.msra.mxu0 0.0
  %527 = vmatprep.mubr.f32.mxu0 0.0
  %v528 = vand.u32 %v25, 4294901760
  %v529 = vsub.f32 %v25, %v528
  %v530 = vand.u32 %v529, 4294901760
  %531 = vmatmul.mubr.f32.gmra.mxu0 %v530
  %v532 = vpop.f32.mrf.mxu0
  %v533 = vadd.f32 %v407, %v532
  %v534 = vpop.f32.mrf.mxu0
  %535 = vmatprep.mubr.f32.mxu0 0.0
  %v536 = vand.u32 %v28, 4294901760
  %v537 = vsub.f32 %v28, %v536
  %v538 = vand.u32 %v537, 4294901760
  %539 = vmatmul.mubr.f32.gmra.mxu0 %v538
  %v540 = vpop.f32.mrf.mxu0
  %v541 = vadd.f32 %v414, %v540
  %v542 = vpop.f32.mrf.mxu0
  %543 = vmatprep.mubr.f32.mxu0 0.0
  %v544 = vand.u32 %v31, 4294901760
  %v545 = vsub.f32 %v31, %v544
  %v546 = vand.u32 %v545, 4294901760
  %547 = vmatmul.mubr.f32.gmra.mxu0 %v546
  %v548 = vpop.f32.mrf.mxu0
  %v549 = vadd.f32 %v421, %v548
  %v550 = vpop.f32.mrf.mxu0
  %551 = vmatprep.mubr.f32.mxu0 0.0
  %v552 = vand.u32 %v34, 4294901760
  %v553 = vsub.f32 %v34, %v552
  %v554 = vand.u32 %v553, 4294901760
  %555 = vmatmul.mubr.f32.gmra.mxu0 %v554
  %v556 = vpop.f32.mrf.mxu0
  %v557 = vadd.f32 %v428, %v556
  %v558 = vpop.f32.mrf.mxu0
  %559 = vmatprep.mubr.f32.mxu0 0.0
  %v560 = vand.u32 %v37, 4294901760
  %v561 = vsub.f32 %v37, %v560
  %v562 = vand.u32 %v561, 4294901760
  %563 = vmatmul.mubr.f32.gmra.mxu0 %v562
  %v564 = vpop.f32.mrf.mxu0
  %v565 = vadd.f32 %v435, %v564
  %v566 = vpop.f32.mrf.mxu0
  %567 = vmatprep.mubr.f32.mxu0 0.0
  %v568 = vand.u32 %v40, 4294901760
  %v569 = vsub.f32 %v40, %v568
  %v570 = vand.u32 %v569, 4294901760
  %571 = vmatmul.mubr.f32.gmra.mxu0 %v570
  %v572 = vpop.f32.mrf.mxu0
  %v573 = vadd.f32 %v442, %v572
  %v574 = vpop.f32.mrf.mxu0
  %575 = vmatprep.mubr.f32.mxu0 0.0
  %v576 = vand.u32 %v43, 4294901760
  %v577 = vsub.f32 %v43, %v576
  %v578 = vand.u32 %v577, 4294901760
  %579 = vmatmul.mubr.f32.gmra.mxu0 %v578
  %v580 = vpop.f32.mrf.mxu0
  %v581 = vadd.f32 %v449, %v580
  %v582 = vpop.f32.mrf.mxu0
  %583 = vmatprep.mubr.f32.mxu0 0.0
  %v584 = vand.u32 %v46, 4294901760
  %v585 = vsub.f32 %v46, %v584
  %v586 = vand.u32 %v585, 4294901760
  %587 = vmatmul.mubr.f32.gmra.mxu0 %v586
  %v588 = vpop.f32.mrf.mxu0
  %v589 = vadd.f32 %v456, %v588
  %v590 = vpop.f32.mrf.mxu0
  %591 = vdwg.mxu0
  %592 = vmatprep.subr.mxu0 0.0
  %593 = vmatpush1.msra.mxu0 0.0
  %594 = vmatprep.subr.mxu0 0.0
  %595 = vmatpush1.msra.mxu0 0.0
  %596 = vmatprep.subr.mxu0 0.0
  %597 = vmatpush1.msra.mxu0 0.0
  %598 = vmatprep.subr.mxu0 0.0
  %599 = vmatpush1.msra.mxu0 0.0
  %600 = vmatprep.subr.mxu0 0.0
  %601 = vmatpush1.msra.mxu0 0.0
  %602 = vmatprep.subr.mxu0 0.0
  %603 = vmatpush1.msra.mxu0 0.0
  %604 = vmatprep.subr.mxu0 0.0
  %605 = vmatpush1.msra.mxu0 0.0
  %606 = vmatprep.subr.mxu0 0.0
  %607 = vmatpush1.msra.mxu0 0.0
  %608 = vmatprep.subr.mxu0 0.0
  %609 = vmatpush1.msra.mxu0 0.0
  %610 = vmatprep.subr.mxu0 0.0
  %611 = vmatpush1.msra.mxu0 0.0
  %612 = vmatprep.subr.mxu0 0.0
  %613 = vmatpush1.msra.mxu0 0.0
  %614 = vmatprep.subr.mxu0 0.0
  %615 = vmatpush1.msra.mxu0 0.0
  %616 = vmatprep.subr.mxu0 0.0
  %v617 = vand.u32 %v22, 4294901760
  %v618 = vsub.f32 %v22, %v617
  %v619 = vand.u32 %v618, 4294901760
  %620 = vmatpush1.msra.mxu0 %v619
  %621 = vmatprep.subr.mxu0 0.0
  %v622 = vand.u32 %v21, 4294901760
  %v623 = vsub.f32 %v21, %v622
  %v624 = vand.u32 %v623, 4294901760
  %625 = vmatpush1.msra.mxu0 %v624
  %626 = vmatprep.subr.mxu0 0.0
  %v627 = vand.u32 %v20, 4294901760
  %v628 = vsub.f32 %v20, %v627
  %v629 = vand.u32 %v628, 4294901760
  %630 = vmatpush1.msra.mxu0 %v629
  %631 = vmatprep.subr.mxu0 0.0
  %v632 = vand.u32 %v19, 4294901760
  %v633 = vsub.f32 %v19, %v632
  %v634 = vand.u32 %v633, 4294901760
  %635 = vmatpush1.msra.mxu0 %v634
  %636 = vmatprep.subr.mxu0 0.0
  %637 = vmatpush2.msra.mxu0 0.0
  %638 = vmatprep.subr.mxu0 0.0
  %639 = vmatpush2.msra.mxu0 0.0
  %640 = vmatprep.subr.mxu0 0.0
  %641 = vmatpush2.msra.mxu0 0.0
  %642 = vmatprep.subr.mxu0 0.0
  %643 = vmatpush2.msra.mxu0 0.0
  %644 = vmatprep.subr.mxu0 0.0
  %645 = vmatpush2.msra.mxu0 0.0
  %646 = vmatprep.subr.mxu0 0.0
  %647 = vmatpush2.msra.mxu0 0.0
  %648 = vmatprep.subr.mxu0 0.0
  %649 = vmatpush2.msra.mxu0 0.0
  %650 = vmatprep.subr.mxu0 0.0
  %651 = vmatpush2.msra.mxu0 0.0
  %652 = vmatprep.subr.mxu0 0.0
  %653 = vmatpush2.msra.mxu0 0.0
  %654 = vmatprep.subr.mxu0 0.0
  %655 = vmatpush2.msra.mxu0 0.0
  %656 = vmatprep.subr.mxu0 0.0
  %657 = vmatpush2.msra.mxu0 0.0
  %658 = vmatprep.subr.mxu0 0.0
  %659 = vmatpush2.msra.mxu0 0.0
  %660 = vmatprep.subr.mxu0 0.0
  %661 = vmatpush2.msra.mxu0 0.0
  %662 = vmatprep.subr.mxu0 0.0
  %663 = vmatpush2.msra.mxu0 0.0
  %664 = vmatprep.subr.mxu0 0.0
  %665 = vmatpush2.msra.mxu0 0.0
  %666 = vmatprep.subr.mxu0 0.0
  %667 = vmatpush2.msra.mxu0 0.0
  %668 = vmatprep.mubr.f32.mxu0 0.0
  %v669 = vand.u32 %v25, 4294901760
  %670 = vmatmul.mubr.f32.gmra.mxu0 %v669
  %v671 = vpop.f32.mrf.mxu0
  %v672 = vadd.f32 %v533, %v671
  %v673 = vpop.f32.mrf.mxu0
  %674 = vmatprep.mubr.f32.mxu0 0.0
  %v675 = vand.u32 %v28, 4294901760
  %676 = vmatmul.mubr.f32.gmra.mxu0 %v675
  %v677 = vpop.f32.mrf.mxu0
  %v678 = vadd.f32 %v541, %v677
  %v679 = vpop.f32.mrf.mxu0
  %680 = vmatprep.mubr.f32.mxu0 0.0
  %v681 = vand.u32 %v31, 4294901760
  %682 = vmatmul.mubr.f32.gmra.mxu0 %v681
  %v683 = vpop.f32.mrf.mxu0
  %v684 = vadd.f32 %v549, %v683
  %v685 = vpop.f32.mrf.mxu0
  %686 = vmatprep.mubr.f32.mxu0 0.0
  %v687 = vand.u32 %v34, 4294901760
  %688 = vmatmul.mubr.f32.gmra.mxu0 %v687
  %v689 = vpop.f32.mrf.mxu0
  %v690 = vadd.f32 %v557, %v689
  %v691 = vpop.f32.mrf.mxu0
  %692 = vmatprep.mubr.f32.mxu0 0.0
  %v693 = vand.u32 %v37, 4294901760
  %694 = vmatmul.mubr.f32.gmra.mxu0 %v693
  %v695 = vpop.f32.mrf.mxu0
  %v696 = vadd.f32 %v565, %v695
  %v697 = vpop.f32.mrf.mxu0
  %698 = vmatprep.mubr.f32.mxu0 0.0
  %v699 = vand.u32 %v40, 4294901760
  %700 = vmatmul.mubr.f32.gmra.mxu0 %v699
  %v701 = vpop.f32.mrf.mxu0
  %v702 = vadd.f32 %v573, %v701
  %v703 = vpop.f32.mrf.mxu0
  %704 = vmatprep.mubr.f32.mxu0 0.0
  %v705 = vand.u32 %v43, 4294901760
  %706 = vmatmul.mubr.f32.gmra.mxu0 %v705
  %v707 = vpop.f32.mrf.mxu0
  %v708 = vadd.f32 %v581, %v707
  %v709 = vpop.f32.mrf.mxu0
  %710 = vmatprep.mubr.f32.mxu0 0.0
  %v711 = vand.u32 %v46, 4294901760
  %712 = vmatmul.mubr.f32.gmra.mxu0 %v711
  %v713 = vpop.f32.mrf.mxu0
  %v714 = vadd.f32 %v589, %v713
  %v715 = vpop.f32.mrf.mxu0
  %716 = vdwg.mxu0
  %717 = vmatprep.subr.mxu0 0.0
  %718 = vmatpush1.msra.mxu0 0.0
  %719 = vmatprep.subr.mxu0 0.0
  %720 = vmatpush1.msra.mxu0 0.0
  %721 = vmatprep.subr.mxu0 0.0
  %722 = vmatpush1.msra.mxu0 0.0
  %723 = vmatprep.subr.mxu0 0.0
  %724 = vmatpush1.msra.mxu0 0.0
  %725 = vmatprep.subr.mxu0 0.0
  %726 = vmatpush1.msra.mxu0 0.0
  %727 = vmatprep.subr.mxu0 0.0
  %728 = vmatpush1.msra.mxu0 0.0
  %729 = vmatprep.subr.mxu0 0.0
  %730 = vmatpush1.msra.mxu0 0.0
  %731 = vmatprep.subr.mxu0 0.0
  %732 = vmatpush1.msra.mxu0 0.0
  %733 = vmatprep.subr.mxu0 0.0
  %734 = vmatpush1.msra.mxu0 0.0
  %735 = vmatprep.subr.mxu0 0.0
  %736 = vmatpush1.msra.mxu0 0.0
  %737 = vmatprep.subr.mxu0 0.0
  %738 = vmatpush1.msra.mxu0 0.0
  %739 = vmatprep.subr.mxu0 0.0
  %740 = vmatpush1.msra.mxu0 0.0
  %741 = vmatprep.subr.mxu0 0.0
  %v742 = vand.u32 %v22, 4294901760
  %743 = vmatpush1.msra.mxu0 %v742
  %744 = vmatprep.subr.mxu0 0.0
  %v745 = vand.u32 %v21, 4294901760
  %746 = vmatpush1.msra.mxu0 %v745
  %747 = vmatprep.subr.mxu0 0.0
  %v748 = vand.u32 %v20, 4294901760
  %749 = vmatpush1.msra.mxu0 %v748
  %750 = vmatprep.subr.mxu0 0.0
  %v751 = vand.u32 %v19, 4294901760
  %752 = vmatpush1.msra.mxu0 %v751
  %753 = vmatprep.subr.mxu0 0.0
  %754 = vmatpush2.msra.mxu0 0.0
  %755 = vmatprep.subr.mxu0 0.0
  %756 = vmatpush2.msra.mxu0 0.0
  %757 = vmatprep.subr.mxu0 0.0
  %758 = vmatpush2.msra.mxu0 0.0
  %759 = vmatprep.subr.mxu0 0.0
  %760 = vmatpush2.msra.mxu0 0.0
  %761 = vmatprep.subr.mxu0 0.0
  %762 = vmatpush2.msra.mxu0 0.0
  %763 = vmatprep.subr.mxu0 0.0
  %764 = vmatpush2.msra.mxu0 0.0
  %765 = vmatprep.subr.mxu0 0.0
  %766 = vmatpush2.msra.mxu0 0.0
  %767 = vmatprep.subr.mxu0 0.0
  %768 = vmatpush2.msra.mxu0 0.0
  %769 = vmatprep.subr.mxu0 0.0
  %770 = vmatpush2.msra.mxu0 0.0
  %771 = vmatprep.subr.mxu0 0.0
  %772 = vmatpush2.msra.mxu0 0.0
  %773 = vmatprep.subr.mxu0 0.0
  %774 = vmatpush2.msra.mxu0 0.0
  %775 = vmatprep.subr.mxu0 0.0
  %776 = vmatpush2.msra.mxu0 0.0
  %777 = vmatprep.subr.mxu0 0.0
  %778 = vmatpush2.msra.mxu0 0.0
  %779 = vmatprep.subr.mxu0 0.0
  %780 = vmatpush2.msra.mxu0 0.0
  %781 = vmatprep.subr.mxu0 0.0
  %782 = vmatpush2.msra.mxu0 0.0
  %783 = vmatprep.subr.mxu0 0.0
  %784 = vmatpush2.msra.mxu0 0.0
  %785 = vmatprep.mubr.f32.mxu0 0.0
  %v786 = vand.u32 %v25, 4294901760
  %787 = vmatmul.mubr.f32.gmra.mxu0 %v786
  %v788 = vpop.f32.mrf.mxu0
  %v789 = vadd.f32 %v672, %v788
  %v790 = vpop.f32.mrf.mxu0
  %791 = vmatprep.mubr.f32.mxu0 0.0
  %v792 = vand.u32 %v28, 4294901760
  %793 = vmatmul.mubr.f32.gmra.mxu0 %v792
  %v794 = vpop.f32.mrf.mxu0
  %v795 = vadd.f32 %v678, %v794
  %v796 = vpop.f32.mrf.mxu0
  %797 = vmatprep.mubr.f32.mxu0 0.0
  %v798 = vand.u32 %v31, 4294901760
  %799 = vmatmul.mubr.f32.gmra.mxu0 %v798
  %v800 = vpop.f32.mrf.mxu0
  %v801 = vadd.f32 %v684, %v800
  %v802 = vpop.f32.mrf.mxu0
  %803 = vmatprep.mubr.f32.mxu0 0.0
  %v804 = vand.u32 %v34, 4294901760
  %805 = vmatmul.mubr.f32.gmra.mxu0 %v804
  %v806 = vpop.f32.mrf.mxu0
  %v807 = vadd.f32 %v690, %v806
  %v808 = vpop.f32.mrf.mxu0
  %809 = vmatprep.mubr.f32.mxu0 0.0
  %v810 = vand.u32 %v37, 4294901760
  %811 = vmatmul.mubr.f32.gmra.mxu0 %v810
  %v812 = vpop.f32.mrf.mxu0
  %v813 = vadd.f32 %v696, %v812
  %v814 = vpop.f32.mrf.mxu0
  %815 = vmatprep.mubr.f32.mxu0 0.0
  %v816 = vand.u32 %v40, 4294901760
  %817 = vmatmul.mubr.f32.gmra.mxu0 %v816
  %v818 = vpop.f32.mrf.mxu0
  %v819 = vadd.f32 %v702, %v818
  %v820 = vpop.f32.mrf.mxu0
  %821 = vmatprep.mubr.f32.mxu0 0.0
  %v822 = vand.u32 %v43, 4294901760
  %823 = vmatmul.mubr.f32.gmra.mxu0 %v822
  %v824 = vpop.f32.mrf.mxu0
  %v825 = vadd.f32 %v708, %v824
  %v826 = vpop.f32.mrf.mxu0
  %827 = vmatprep.mubr.f32.mxu0 0.0
  %v828 = vand.u32 %v46, 4294901760
  %829 = vmatmul.mubr.f32.gmra.mxu0 %v828
  %v830 = vpop.f32.mrf.mxu0
  %v831 = vadd.f32 %v714, %v830
  %v832 = vpop.f32.mrf.mxu0
  %833 = vdwg.mxu0
  %834 = vst.msk [vmem:[%s2] sm:$0xff] %vm23, %v789
  %835 = vst.msk [vmem:[%s2 + $0x8] sm:$0xff] %vm23, %v795
  %836 = vst.msk [vmem:[%s2 + $0x10] sm:$0xff] %vm23, %v801
  %837 = vst.msk [vmem:[%s2 + $0x18] sm:$0xff] %vm23, %v807
  %838 = vst.msk [vmem:[%s2 + $0x20] sm:$0xff] %vm23, %v813
  %839 = vst.msk [vmem:[%s2 + $0x28] sm:$0xff] %vm23, %v819
  %840 = vst.msk [vmem:[%s2 + $0x30] sm:$0xff] %vm23, %v825
  %841 = vst.msk [vmem:[%s2 + $0x38] sm:$0xff] %vm23, %v831
  // Predicated region
  $region10: #{haar_downsampling.1} parent=0 // pred_check
    _
  $region11: #{haar_downsampling.1} parent=0 // pred_check_branch
    %843 = sbr.rel (0) target = $region13
  $region12: #{haar_downsampling.1} parent=0 // pred_region
    _
  $region13: #{haar_downsampling.1} parent=0 // pred_fallthru
    _
  // Predicated region
  $region14: #{haar_downsampling.1} parent=0 // pred_check
    _
  $region15: #{haar_downsampling.1} parent=0 // pred_check_branch
    %845 = sbr.rel (0) target = $region17
  $region16: #{haar_downsampling.1} parent=0 // pred_region
    _
  $region17: #{haar_downsampling.1} parent=0 // pred_fallthru
    _

</llo_original>
